<compile_context>
chip_gen: v7x
topology: tpu7x:2x2x1
jax: 0.10.0
libtpu: 0.0.40
codegen_flags: <defaults>
</compile_context>

<pallas_src>
import functools

import jax
import jax.numpy as jnp
from jax.experimental import pallas as pl
from jax.experimental.pallas import tpu as pltpu

LN_EPS = 1e-5


def _round_up(x, m):
    return (x + m - 1) // m * m


def _patch_embed_kernel(p_ref, w_ref, b_ref, g_ref, beta_ref, o_ref, *, d_real, d_pad):
    # Conv-as-matmul on the MXU: [TM, Kp] (bf16) @ [Kp, Dp] (bf16) -> f32.
    y = jnp.dot(p_ref[...], w_ref[...], preferred_element_type=jnp.float32)
    y = y + b_ref[...]                                  # broadcast (1, Dp), f32

    # LayerNorm over the real embed_dim lanes (padded lanes of y are exact 0).
    inv_d = jnp.float32(1.0 / d_real)
    mean = jnp.sum(y, axis=-1, keepdims=True) * inv_d   # padded lanes contribute 0
    centered = y - mean
    if d_pad != d_real:
        lane = jax.lax.broadcasted_iota(jnp.int32, y.shape, 1)
        sq = jnp.where(lane < d_real, centered * centered, 0.0)
    else:
        sq = centered * centered
    var = jnp.sum(sq, axis=-1, keepdims=True) * inv_d
    # Fold gamma into the rsqrt factor: one mul + one add per element.
    scale = jax.lax.rsqrt(var + LN_EPS) * g_ref[...]
    o_ref[...] = (centered * scale + beta_ref[...]).astype(o_ref.dtype)


def _im2col(x, kernel_size, stride, pad):
    """x: [B, C, Hin, Win] (NCHW, like PyTorch). Returns [B*Ho*Wo, C*k*k]."""
    B, C, Hin, Win = x.shape
    k = kernel_size
    Ho = (Hin + 2 * pad - k) // stride + 1
    Wo = (Win + 2 * pad - k) // stride + 1
    x_pad = jnp.pad(x, ((0, 0), (0, 0), (pad, pad), (pad, pad)))
    rows = []
    for ki in range(k):
        for kj in range(k):
            sl = x_pad[:, :,
                       ki: ki + (Ho - 1) * stride + 1: stride,
                       kj: kj + (Wo - 1) * stride + 1: stride]
            rows.append(sl)
    # [k, k, B, C, Ho, Wo] -> [B, Ho, Wo, C, ki, kj] so flat col order is (c, ki, kj)
    stacked = jnp.stack(rows, axis=0).reshape(k, k, B, C, Ho, Wo)
    patches = jnp.transpose(stacked, (2, 4, 5, 3, 0, 1))
    return patches.reshape(B * Ho * Wo, C * k * k), Ho, Wo


def patch_embed_forward(x, weight, bias, gamma, beta, *, patch_size, kernel_size,
                        block_rows=512):
    """x: [B, C, Hin, Win].  weight: [embed_dim, C, k, k] (PyTorch layout).
    Returns (out [B, Ho*Wo, embed_dim], (Ho, Wo))."""
    B, C, Hin, Win = x.shape
    embed_dim = weight.shape[0]
    k = kernel_size
    stride = patch_size
    pad = k // 2

    patches, Ho, Wo = _im2col(x, k, stride, pad)          # [N, K] f32
    N, K = patches.shape

    # Lane/sublane-aligned padded shapes.
    Kp = _round_up(K, 128)
    Dp = _round_up(embed_dim, 128)
    # TM sized for v7x's 64 MiB VMEM (much smaller than 128 MiB on v5e/v6e);
    # shrink for tiny problems so the grid has no wasted rows.
    TM = min(block_rows, _round_up(N, 8))
    Np = _round_up(N, TM)

    # bf16 matmul operands (HBM-bound kernel); zero padding preserves results.
    patches_p = jnp.pad(patches.astype(jnp.bfloat16), ((0, Np - N), (0, Kp - K)))
    w_flat = weight.reshape(embed_dim, C * k * k).T.astype(jnp.bfloat16)   # [K, D]
    w_p = jnp.pad(w_flat, ((0, Kp - K), (0, Dp - embed_dim)))
    b_p = jnp.pad(bias.astype(jnp.float32)[None, :], ((0, 0), (0, Dp - embed_dim)))
    g_p = jnp.pad(gamma.astype(jnp.float32)[None, :], ((0, 0), (0, Dp - embed_dim)))
    be_p = jnp.pad(beta.astype(jnp.float32)[None, :], ((0, 0), (0, Dp - embed_dim)))

    grid = (Np // TM,)
    kernel = functools.partial(_patch_embed_kernel, d_real=embed_dim, d_pad=Dp)

    cost = pl.CostEstimate(
        flops=2 * Np * Kp * Dp,
        transcendentals=0,
        bytes_accessed=(patches_p.size * 2 + w_p.size * 2
                        + 3 * Dp * 4 + Np * Dp * 4),
    )

    out = pl.pallas_call(
        kernel,
        out_shape=jax.ShapeDtypeStruct((Np, Dp), jnp.float32),
        grid=grid,
        in_specs=[
            pl.BlockSpec((TM, Kp), lambda i: (i, 0)),   # patches tile (streamed)
            pl.BlockSpec((Kp, Dp), lambda i: (0, 0)),   # weight (resident)
            pl.BlockSpec((1, Dp), lambda i: (0, 0)),    # bias (resident)
            pl.BlockSpec((1, Dp), lambda i: (0, 0)),    # gamma (resident)
            pl.BlockSpec((1, Dp), lambda i: (0, 0)),    # beta (resident)
        ],
        out_specs=pl.BlockSpec((TM, Dp), lambda i: (i, 0)),
        compiler_params=pltpu.CompilerParams(
            dimension_semantics=("parallel",),          # megacore split on v7x
            vmem_limit_bytes=48 * 1024 * 1024,
        ),
        cost_estimate=cost,
    )(patches_p, w_p, b_p, g_p, be_p)

    out = out[:N, :embed_dim].astype(x.dtype)
    return out.reshape(B, Ho * Wo, embed_dim), (Ho, Wo)


def _reference(x, weight, bias, gamma, beta, *, patch_size, kernel_size):
    pad = kernel_size // 2
    y = jax.lax.conv_general_dilated(
        x, weight,
        window_strides=(patch_size, patch_size),
        padding=[(pad, pad), (pad, pad)],
        dimension_numbers=("NCHW", "OIHW", "NCHW"),
    ) + bias[None, :, None, None]
    B, D, H, W = y.shape
    y = y.reshape(B, D, H * W).transpose(0, 2, 1)  # [B, HW, D]
    mean = jnp.mean(y, axis=-1, keepdims=True)
    var = jnp.mean((y - mean) ** 2, axis=-1, keepdims=True)
    return (y - mean) / jnp.sqrt(var + LN_EPS) * gamma + beta, (H, W)


if __name__ == "__main__":
    # Small config consistent with the module: img_size=16, patch_size=4,
    # kernel_size=3 (overlap=True), in_chans=4, embed_dim=32.
    B, C, IMG = 2, 4, 16
    PATCH, KSIZE, EMBED = 4, 3, 32

    key = jax.random.PRNGKey(0)
    kx, kw, kb = jax.random.split(key, 3)
    x = jax.random.normal(kx, (B, C, IMG, IMG), dtype=jnp.float32)
    weight = jax.random.normal(kw, (EMBED, C, KSIZE, KSIZE), dtype=jnp.float32) * 0.05
    bias = jax.random.normal(kb, (EMBED,), dtype=jnp.float32) * 0.05
    gamma = jnp.ones((EMBED,), dtype=jnp.float32)
    beta = jnp.zeros((EMBED,), dtype=jnp.float32)

    out, (H, W) = patch_embed_forward(
        x, weight, bias, gamma, beta, patch_size=PATCH, kernel_size=KSIZE)
    out = jax.block_until_ready(out)

    ref, (Hr, Wr) = _reference(
        x, weight, bias, gamma, beta, patch_size=PATCH, kernel_size=KSIZE)
    assert (H, W) == (Hr, Wr) == (IMG // PATCH, IMG // PATCH)
    assert out.shape == (B, H * W, EMBED)
    # Slightly looser tolerance: matmul operands are bf16 (f32 accumulation).
    assert jnp.allclose(out, ref, atol=2e-2, rtol=2e-2)

    print("KERNEL_OK")
</pallas_src>

<mosaic_0001>
module attributes {stable_mosaic.version = 11 : i64} {
  func.func @_patch_embed_kernel(%arg0: i32, %arg1: memref<32x128xbf16, #tpu.memory_space<vmem>>, %arg2: memref<128x128xbf16, #tpu.memory_space<vmem>>, %arg3: memref<1x128xf32, #tpu.memory_space<vmem>>, %arg4: memref<1x128xf32, #tpu.memory_space<vmem>>, %arg5: memref<1x128xf32, #tpu.memory_space<vmem>>, %arg6: memref<32x128xf32, #tpu.memory_space<vmem>>) attributes {dimension_semantics = [#tpu.dimension_semantics<parallel>], iteration_bounds = array<i64: 1>, scalar_prefetch = 0 : i64, scratch_operands = 0 : i64, tpu.core_type = #tpu.core_type<tc>, window_params = [{transform_indices = @transform_0, window_bounds = array<i64: 32, 128>}, {pipeline_mode = #tpu.pipeline_mode<synchronous>, transform_indices = @transform_1, window_bounds = array<i64: 128, 128>}, {pipeline_mode = #tpu.pipeline_mode<synchronous>, transform_indices = @transform_2, window_bounds = array<i64: 1, 128>}, {pipeline_mode = #tpu.pipeline_mode<synchronous>, transform_indices = @transform_3, window_bounds = array<i64: 1, 128>}, {pipeline_mode = #tpu.pipeline_mode<synchronous>, transform_indices = @transform_4, window_bounds = array<i64: 1, 128>}, {transform_indices = @transform_5, window_bounds = array<i64: 32, 128>}]} {
    %c0 = arith.constant 0 : index
    %c0_0 = arith.constant 0 : index
    %0 = vector.load %arg1[%c0, %c0_0] : memref<32x128xbf16, #tpu.memory_space<vmem>>, vector<32x128xbf16>
    %c0_1 = arith.constant 0 : index
    %c0_2 = arith.constant 0 : index
    %1 = vector.load %arg2[%c0_1, %c0_2] : memref<128x128xbf16, #tpu.memory_space<vmem>>, vector<128x128xbf16>
    %cst = arith.constant dense<0.000000e+00> : vector<32x128xf32>
    %2 = tpu.matmul %0, %1, %cst {dimension_numbers = #tpu.dot_dimension_numbers<[1], [0], [0], [1], [0, 0, 1, 1], [], []>} : vector<32x128xbf16>, vector<128x128xbf16>, vector<32x128xf32> -> vector<32x128xf32>
    %c0_3 = arith.constant 0 : index
    %c0_4 = arith.constant 0 : index
    %3 = vector.load %arg3[%c0_3, %c0_4] : memref<1x128xf32, #tpu.memory_space<vmem>>, vector<1x128xf32>
    %4 = vector.broadcast %3 : vector<1x128xf32> to vector<32x128xf32>
    %5 = arith.addf %2, %4 : vector<32x128xf32>
    %cst_5 = arith.constant dense<0.000000e+00> : vector<32xf32>
    %6 = vector.multi_reduction <add>, %5, %cst_5 [1] : vector<32x128xf32> to vector<32xf32>
    %7 = vector.shape_cast %6 : vector<32xf32> to vector<32x1xf32>
    %cst_6 = arith.constant 3.125000e-02 : f32
    %8 = vector.broadcast %cst_6 : f32 to vector<32x1xf32>
    %9 = arith.mulf %7, %8 : vector<32x1xf32>
    %10 = vector.broadcast %9 : vector<32x1xf32> to vector<32x128xf32>
    %11 = arith.subf %5, %10 : vector<32x128xf32>
    %12 = tpu.iota {dimensions = array<i32: 1>} : vector<32x128xi32>
    %c32_i32 = arith.constant 32 : i32
    %13 = vector.broadcast %c32_i32 : i32 to vector<32x128xi32>
    %14 = arith.cmpi slt, %12, %13 : vector<32x128xi32>
    %15 = arith.mulf %11, %11 : vector<32x128xf32>
    %cst_7 = arith.constant 0.000000e+00 : f32
    %16 = vector.broadcast %cst_7 : f32 to vector<32x128xf32>
    %17 = arith.select %14, %15, %16 : vector<32x128xi1>, vector<32x128xf32>
    %cst_8 = arith.constant dense<0.000000e+00> : vector<32xf32>
    %18 = vector.multi_reduction <add>, %17, %cst_8 [1] : vector<32x128xf32> to vector<32xf32>
    %19 = vector.shape_cast %18 : vector<32xf32> to vector<32x1xf32>
    %cst_9 = arith.constant 3.125000e-02 : f32
    %20 = vector.broadcast %cst_9 : f32 to vector<32x1xf32>
    %21 = arith.mulf %19, %20 : vector<32x1xf32>
    %cst_10 = arith.constant 9.99999974E-6 : f32
    %22 = vector.broadcast %cst_10 : f32 to vector<32x1xf32>
    %23 = arith.addf %21, %22 : vector<32x1xf32>
    %24 = math.rsqrt %23 : vector<32x1xf32>
    %c0_11 = arith.constant 0 : index
    %c0_12 = arith.constant 0 : index
    %25 = vector.load %arg4[%c0_11, %c0_12] : memref<1x128xf32, #tpu.memory_space<vmem>>, vector<1x128xf32>
    %26 = vector.broadcast %24 : vector<32x1xf32> to vector<32x128xf32>
    %27 = vector.broadcast %25 : vector<1x128xf32> to vector<32x128xf32>
    %28 = arith.mulf %26, %27 : vector<32x128xf32>
    %29 = arith.mulf %11, %28 : vector<32x128xf32>
    %c0_13 = arith.constant 0 : index
    %c0_14 = arith.constant 0 : index
    %30 = vector.load %arg5[%c0_13, %c0_14] : memref<1x128xf32, #tpu.memory_space<vmem>>, vector<1x128xf32>
    %31 = vector.broadcast %30 : vector<1x128xf32> to vector<32x128xf32>
    %32 = arith.addf %29, %31 : vector<32x128xf32>
    %c0_15 = arith.constant 0 : index
    %c0_16 = arith.constant 0 : index
    %33 = vector.load %arg6[%c0_15, %c0_16] : memref<32x128xf32, #tpu.memory_space<vmem>>, vector<32x128xf32>
    tpu.vector_store %arg6[%c0_15, %c0_16], %32 {strides = array<i32>} : memref<32x128xf32, #tpu.memory_space<vmem>>, vector<32x128xf32>,
    return
  }
  func.func @transform_0(%arg0: i32) -> (i32, i32) {
    %c0_i32 = arith.constant 0 : i32
    %c0_i32_0 = arith.constant 0 : i32
    return %arg0, %c0_i32 : i32, i32
  }
  func.func @transform_1(%arg0: i32) -> (i32, i32) {
    %c0_i32 = arith.constant 0 : i32
    %c0_i32_0 = arith.constant 0 : i32
    %c0_i32_1 = arith.constant 0 : i32
    return %c0_i32, %c0_i32_0 : i32, i32
  }
  func.func @transform_2(%arg0: i32) -> (i32, i32) {
    %c0_i32 = arith.constant 0 : i32
    %c0_i32_0 = arith.constant 0 : i32
    %c0_i32_1 = arith.constant 0 : i32
    return %c0_i32, %c0_i32_0 : i32, i32
  }
  func.func @transform_3(%arg0: i32) -> (i32, i32) {
    %c0_i32 = arith.constant 0 : i32
    %c0_i32_0 = arith.constant 0 : i32
    %c0_i32_1 = arith.constant 0 : i32
    return %c0_i32, %c0_i32_0 : i32, i32
  }
  func.func @transform_4(%arg0: i32) -> (i32, i32) {
    %c0_i32 = arith.constant 0 : i32
    %c0_i32_0 = arith.constant 0 : i32
    %c0_i32_1 = arith.constant 0 : i32
    return %c0_i32, %c0_i32_0 : i32, i32
  }
  func.func @transform_5(%arg0: i32) -> (i32, i32) {
    %c0_i32 = arith.constant 0 : i32
    %c0_i32_0 = arith.constant 0 : i32
    return %arg0, %c0_i32 : i32, i32
  }
}

</mosaic_0001>

<llo_original>
// kernel: tpu_custom_call.1
$region0: #{tpu_custom_call.1}
  #allocation0 [shape = 'u32[]', space=smem, size = 0x4, offset = 0x4, fixed_abs, tag = 'smem constant byte address 0x4 - core index']
  #allocation1 [shape = 'u32[144,128]{1,0:T(1,128)}', space=vmem, size = 0x12000, scoped, tag = 'internal scratch']
  %s0 = inlined_call_operand.hbm [shape: bf16[32,128], index: 0, kind: input, shape index: {}]
  %s1 = inlined_call_operand.hbm [shape: bf16[128,128], index: 1, kind: input, shape index: {}]
  %s2 = inlined_call_operand.vmem [shape: f32[1,128], index: 2, kind: input, shape index: {}]
  %s3 = inlined_call_operand.vmem [shape: f32[1,128], index: 3, kind: input, shape index: {}]
  %s4 = inlined_call_operand.vmem [shape: f32[1,128], index: 4, kind: input, shape index: {}]
  %s5 = inlined_call_operand.hbm [shape: f32[32,128], index: 5, kind: output, shape index: {}]
  %s6 = sld [smem:[#allocation0]]
  $region38: #{tpu_custom_call.1} parent=0
    _
  %s8 = ssub.s32 1, %s6
  %s9 = scalar_select 0, %s8, %s6
  $region1: #{tpu_custom_call.1} parent=0
    #allocation2 [shape = 'u8[8192]{0}', space=vmem, size = 0x2000, scoped, tag = 'input window, operand 0, single buffered']
    #allocation3 [shape = 's32[1]{0}', space=sflag, size = 0x4, scoped, tag = 'scoped memory for tpu_custom_call.1']
    #allocation4 [shape = 's32[1]{0}', space=sflag, size = 0x4, scoped, tag = 'scoped memory for tpu_custom_call.1']
    #allocation5 [shape = 'u8[32768]{0}', space=vmem, size = 0x8000, scoped, tag = 'input window, operand 1, single buffered']
    #allocation6 [shape = 's32[1]{0}', space=sflag, size = 0x4, scoped, tag = 'scoped memory for tpu_custom_call.1']
    #allocation7 [shape = 'u8[16384]{0}', space=vmem, size = 0x4000, scoped, tag = 'output window, operand 0, single buffered']
    %10 = vsyncpa [#allocation3], 0
    %11 = vsyncpa [#allocation6], 0
    %12 = vsyncpa [#allocation4], 0
    // Predicated region
    $region2: #{tpu_custom_call.1} parent=1 // pred_check
      _
    $region3: #{tpu_custom_call.1} parent=1 // pred_check_branch
      %14 = sbr.rel (0) target = $region5
    $region4: #{tpu_custom_call.1} parent=1 // pred_region
      %s16 = ssub.s32 256, 256
      %17 = vsyncadd [#allocation3], %s16
      %s18 = sshll.u32 [#allocation2], 4
      %s19 = int_to_ptr.vmem [resolvable:$true] %s18
      %24 = dma.hbm_to_vmem [thread:$0]  %s0, 256, %s19, [#allocation3], 64, 64, 4
    $region5: #{tpu_custom_call.1} parent=1 // pred_fallthru
      _
    // Predicated region
    $region6: #{tpu_custom_call.1} parent=1 // pred_check
      _
    $region7: #{tpu_custom_call.1} parent=1 // pred_check_branch
      %26 = sbr.rel (0) target = $region9
    $region8: #{tpu_custom_call.1} parent=1 // pred_region
      %s28 = ssub.s32 1024, 1024
      %29 = vsyncadd [#allocation6], %s28
      %s30 = sshll.u32 [#allocation5], 4
      %s31 = int_to_ptr.vmem [resolvable:$true] %s30
      %36 = dma.hbm_to_vmem [thread:$0]  %s1, 1024, %s31, [#allocation6], 64, 64, 4
    $region9: #{tpu_custom_call.1} parent=1 // pred_fallthru
      _
    // Predicated region
    $region10: #{tpu_custom_call.1} parent=1 // pred_check
      _
    $region11: #{tpu_custom_call.1} parent=1 // pred_check_branch
      %38 = sbr.rel (0) target = $region13
    $region12: #{tpu_custom_call.1} parent=1 // pred_region
      _
    $region13: #{tpu_custom_call.1} parent=1 // pred_fallthru
      _
    // Predicated region
    $region14: #{tpu_custom_call.1} parent=1 // pred_check
      _
    $region15: #{tpu_custom_call.1} parent=1 // pred_check_branch
      %40 = sbr.rel (0) target = $region17
    $region16: #{tpu_custom_call.1} parent=1 // pred_region
      _
    $region17: #{tpu_custom_call.1} parent=1 // pred_fallthru
      _
    // Predicated region
    $region18: #{tpu_custom_call.1} parent=1 // pred_check
      _
    $region19: #{tpu_custom_call.1} parent=1 // pred_check_branch
      %42 = sbr.rel (0) target = $region21
    $region20: #{tpu_custom_call.1} parent=1 // pred_region
      _
    $region21: #{tpu_custom_call.1} parent=1 // pred_fallthru
      _
    // Predicated region
    $region22: #{tpu_custom_call.1} parent=1 // pred_check
      _
    $region23: #{tpu_custom_call.1} parent=1 // pred_check_branch
      %44 = sbr.rel (0) target = $region25
    $region24: #{tpu_custom_call.1} parent=1 // pred_region
      %45 = dma.done [#allocation3], 256
    $region25: #{tpu_custom_call.1} parent=1 // pred_fallthru
      _
    // Predicated region
    $region26: #{tpu_custom_call.1} parent=1 // pred_check
      _
    $region27: #{tpu_custom_call.1} parent=1 // pred_check_branch
      %47 = sbr.rel (0) target = $region29
    $region28: #{tpu_custom_call.1} parent=1 // pred_region
      %48 = dma.done [#allocation6], 1024
    $region29: #{tpu_custom_call.1} parent=1 // pred_fallthru
      _
    %v50 = vld [vmem:[#allocation2] sm:$0xf]
    %v51 = vld [vmem:[#allocation2 + $0x4] sm:$0xf]
    %v52 = vld [vmem:[#allocation2 + $0x8] sm:$0xf]
    %v53 = vld [vmem:[#allocation2 + $0xc] sm:$0xf]
    %v54 = vld [vmem:[#allocation5] sm:$0xf]
    %v55 = vld [vmem:[#allocation5 + $0x4] sm:$0xf]
    %v56 = vld [vmem:[#allocation5 + $0x8] sm:$0xf]
    %v57 = vld [vmem:[#allocation5 + $0xc] sm:$0xf]
    %v58 = vld [vmem:[#allocation5 + $0x10] sm:$0xf]
    %v59 = vld [vmem:[#allocation5 + $0x14] sm:$0xf]
    %v60 = vld [vmem:[#allocation5 + $0x18] sm:$0xf]
    %v61 = vld [vmem:[#allocation5 + $0x1c] sm:$0xf]
    %v62 = vld [vmem:[#allocation5 + $0x20] sm:$0xf]
    %v63 = vld [vmem:[#allocation5 + $0x24] sm:$0xf]
    %v64 = vld [vmem:[#allocation5 + $0x28] sm:$0xf]
    %v65 = vld [vmem:[#allocation5 + $0x2c] sm:$0xf]
    %v66 = vld [vmem:[#allocation5 + $0x30] sm:$0xf]
    %v67 = vld [vmem:[#allocation5 + $0x34] sm:$0xf]
    %v68 = vld [vmem:[#allocation5 + $0x38] sm:$0xf]
    %v69 = vld [vmem:[#allocation5 + $0x3c] sm:$0xf]
    %v70 = vld [vmem:[%s2] sm:$0x1]
    %v72 = vlaneseq
    %v73 = vshrl.u32 %v72, 7
    %v74 = vsub.s32 0, %v73
    %v75 = vrot.slane %v70, %v74
    %v81 = vunpack.c.l.b16 %v50
    %v82 = vunpack.c.l.b16 %v51
    %v83 = vunpack.c.l.b16 %v52
    %v84 = vunpack.c.l.b16 %v53
    %v85 = vpack.c.b16 %v82, %v81
    %v86 = vpack.c.b16 %v84, %v83
    %v105 = vunpack.c.l.b16 %v54
    %v106 = vunpack.c.l.b16 %v55
    %v107 = vunpack.c.l.b16 %v56
    %v108 = vunpack.c.l.b16 %v57
    %v109 = vunpack.c.l.b16 %v58
    %v110 = vunpack.c.l.b16 %v59
    %v111 = vunpack.c.l.b16 %v60
    %v112 = vunpack.c.l.b16 %v61
    %v113 = vunpack.c.l.b16 %v62
    %v114 = vunpack.c.l.b16 %v63
    %v115 = vunpack.c.l.b16 %v64
    %v116 = vunpack.c.l.b16 %v65
    %v117 = vunpack.c.l.b16 %v66
    %v118 = vunpack.c.l.b16 %v67
    %v119 = vunpack.c.l.b16 %v68
    %v120 = vunpack.c.l.b16 %v69
    %v121 = vpack.c.b16 %v106, %v105
    %v122 = vpack.c.b16 %v108, %v107
    %v123 = vpack.c.b16 %v110, %v109
    %v124 = vpack.c.b16 %v112, %v111
    %v125 = vpack.c.b16 %v114, %v113
    %v126 = vpack.c.b16 %v116, %v115
    %v127 = vpack.c.b16 %v118, %v117
    %v128 = vpack.c.b16 %v120, %v119
    %137 = vmatprep.subr.bf16.mxu0 0
    %138 = vmatpush1.bf16.msra.mxu0 %v121
    %139 = vmatprep.subr.bf16.mxu0 0
    %140 = vmatpush1.bf16.msra.mxu0 %v122
    %141 = vmatprep.subr.bf16.mxu0 0
    %142 = vmatpush1.bf16.msra.mxu0 %v123
    %143 = vmatprep.subr.bf16.mxu0 0
    %144 = vmatpush1.bf16.msra.mxu0 %v124
    %145 = vmatprep.subr.bf16.mxu0 0
    %146 = vmatpush1.bf16.msra.mxu0 %v125
    %147 = vmatprep.subr.bf16.mxu0 0
    %148 = vmatpush1.bf16.msra.mxu0 %v126
    %149 = vmatprep.subr.bf16.mxu0 0
    %150 = vmatpush1.bf16.msra.mxu0 %v127
    %151 = vmatprep.subr.bf16.mxu0 0
    %152 = vmatpush1.bf16.msra.mxu0 %v128
    %153 = vmatprep.subr.bf16.mxu0 0
    %154 = vmatpush1.bf16.msra.mxu0 0
    %155 = vmatprep.subr.bf16.mxu0 0
    %156 = vmatpush1.bf16.msra.mxu0 0
    %157 = vmatprep.subr.bf16.mxu0 0
    %158 = vmatpush1.bf16.msra.mxu0 0
    %159 = vmatprep.subr.bf16.mxu0 0
    %160 = vmatpush1.bf16.msra.mxu0 0
    %161 = vmatprep.subr.bf16.mxu0 0
    %162 = vmatpush1.bf16.msra.mxu0 0
    %163 = vmatprep.subr.bf16.mxu0 0
    %164 = vmatpush1.bf16.msra.mxu0 0
    %165 = vmatprep.subr.bf16.mxu0 0
    %166 = vmatpush1.bf16.msra.mxu0 0
    %167 = vmatprep.subr.bf16.mxu0 0
    %168 = vmatpush1.bf16.msra.mxu0 0
    %169 = vmatprep.mubr.bf16.mxu0 0
    %170 = vmatmul.mubr.bf16.gmra.mrb[0].mxu0 %v85
    %v171 = vpop.f32.mrb[0].mxu0
    %v172 = vadd.f32 %v75, %v171
    %v173 = vpop.f32.mrb[0].mxu0
    %v174 = vpop.f32.mrb[0].mxu0
    %v175 = vadd.f32 %v75, %v174
    %v176 = vpop.f32.mrb[0].mxu0
    %177 = vmatprep.mubr.bf16.mxu0 0
    %178 = vmatmul.mubr.bf16.gmra.mrb[0].mxu0 %v86
    %v179 = vpop.f32.mrb[0].mxu0
    %v180 = vadd.f32 %v75, %v179
    %v181 = vpop.f32.mrb[0].mxu0
    %v182 = vpop.f32.mrb[0].mxu0
    %v183 = vadd.f32 %v75, %v182
    %v184 = vpop.f32.mrb[0].mxu0
    %185 = vdwg.mxu0
    %186 = vadd.xlane.f32.xlu0 %v172
    %v187 = vpop.xlane.xlu0 %186
    %188 = vadd.xlane.f32.xlu0 %v175
    %v189 = vpop.xlane.xlu0 %188
    %190 = vadd.xlane.f32.xlu0 %v180
    %v191 = vpop.xlane.xlu0 %190
    %192 = vadd.xlane.f32.xlu0 %v183
    %v193 = vpop.xlane.xlu0 %192
    %v194 = vmul.f32 %v187, 0.03125
    %v195 = vmul.f32 %v189, 0.03125
    %v196 = vmul.f32 %v191, 0.03125
    %v197 = vmul.f32 %v193, 0.03125
    %v198 = vsub.f32 %v172, %v194
    %v199 = vsub.f32 %v175, %v195
    %v200 = vsub.f32 %v180, %v196
    %v201 = vsub.f32 %v183, %v197
    %v202 = vlaneseq
    %v203 = vand.u32 %v202, 127
    %vm204 = vcmp.lt.s32.totalorder %v203, 32
    %v205 = vmul.f32 %v198, %v198
    %v206 = vmul.f32 %v199, %v199
    %v207 = vmul.f32 %v200, %v200
    %v208 = vmul.f32 %v201, %v201
    %v209 = vsel %vm204, %v205, 0.0
    %v210 = vsel %vm204, %v206, 0.0
    %v211 = vsel %vm204, %v207, 0.0
    %v212 = vsel %vm204, %v208, 0.0
    %213 = vadd.xlane.f32.xlu0 %v209
    %v214 = vpop.xlane.xlu0 %213
    %215 = vadd.xlane.f32.xlu0 %v210
    %v216 = vpop.xlane.xlu0 %215
    %217 = vadd.xlane.f32.xlu0 %v211
    %v218 = vpop.xlane.xlu0 %217
    %219 = vadd.xlane.f32.xlu0 %v212
    %v220 = vpop.xlane.xlu0 %219
    %v221 = vmul.f32 %v214, 0.03125
    %v222 = vmul.f32 %v216, 0.03125
    %v223 = vmul.f32 %v218, 0.03125
    %v224 = vmul.f32 %v220, 0.03125
    %v225 = vadd.f32 %v221, 1e-05
    %v226 = vadd.f32 %v222, 1e-05
    %v227 = vadd.f32 %v223, 1e-05
    %v228 = vadd.f32 %v224, 1e-05
    %v229 = vrsqrt.pop %v225
    %v230 = vrsqrt.pop %v226
    %v231 = vrsqrt.pop %v227
    %v232 = vrsqrt.pop %v228
    %v233 = vld [vmem:[%s3] sm:$0x1]
    %v235 = vlaneseq
    %v236 = vshrl.u32 %v235, 7
    %v237 = vsub.s32 0, %v236
    %v238 = vrot.slane %v233, %v237
    %v240 = vmul.f32 %v229, %v238
    %v241 = vmul.f32 %v230, %v238
    %v242 = vmul.f32 %v231, %v238
    %v243 = vmul.f32 %v232, %v238
    %v244 = vmul.f32 %v198, %v240
    %v245 = vmul.f32 %v199, %v241
    %v246 = vmul.f32 %v200, %v242
    %v247 = vmul.f32 %v201, %v243
    %v248 = vld [vmem:[%s4] sm:$0x1]
    %v250 = vlaneseq
    %v251 = vshrl.u32 %v250, 7
    %v252 = vsub.s32 0, %v251
    %v253 = vrot.slane %v248, %v252
    %v255 = vadd.f32 %v244, %v253
    %v256 = vadd.f32 %v245, %v253
    %v257 = vadd.f32 %v246, %v253
    %v258 = vadd.f32 %v247, %v253
    %259 = vst [vmem:[#allocation7] sm:$0xff] %v255
    %260 = vst [vmem:[#allocation7 + $0x8] sm:$0xff] %v256
    %261 = vst [vmem:[#allocation7 + $0x10] sm:$0xff] %v257
    %262 = vst [vmem:[#allocation7 + $0x18] sm:$0xff] %v258
    // Predicated region
    $region30: #{tpu_custom_call.1} parent=1 // pred_check
      _
    $region31: #{tpu_custom_call.1} parent=1 // pred_check_branch
      %264 = sbr.rel (0) target = $region33
    $region32: #{tpu_custom_call.1} parent=1 // pred_region
      %s266 = ssub.s32 512, 512
      %267 = vsyncadd [#allocation4], %s266
      %s268 = sshll.u32 [#allocation7], 4
      %s269 = int_to_ptr.vmem [resolvable:$true] %s268
      %274 = dma.vmem_to_hbm [thread:$0]  %s269, 512, %s5, [#allocation4], 128, 128, 8
    $region33: #{tpu_custom_call.1} parent=1 // pred_fallthru
      _
    // Predicated region
    $region34: #{tpu_custom_call.1} parent=1 // pred_check
      _
    $region35: #{tpu_custom_call.1} parent=1 // pred_check_branch
      %276 = sbr.rel (0) target = $region37
    $region36: #{tpu_custom_call.1} parent=1 // pred_region
      %277 = dma.done [#allocation4], 512
    $region37: #{tpu_custom_call.1} parent=1 // pred_fallthru
      _
    %278 = vsyncpa [#allocation3], 1
    %279 = vsyncpa [#allocation6], 1
    %280 = vsyncpa [#allocation4], 1

</llo_original>
